<compile_context>
chip_gen: v5e
topology: v5e:2x2
jax: 0.10.0
libtpu: 0.0.40
codegen_flags: <defaults>
</compile_context>

<pallas_src>
import jax
import jax.numpy as jnp
from jax.experimental import pallas as pl
from jax.experimental.pallas import tpu as pltpu

_LANES = 128          # lane width of a vreg (last dim must be lane-dense)
_MAX_TILE_ROWS = 2048  # 2048 * 128 * 4 B = 1 MiB per output tile (x2 buffers)


def _constant_kernel(value_ref, out_ref):
    # value_ref: (1, 1) scalar parameter in SMEM
    # out_ref:   (tile_rows, 128) lane-dense output tile in VMEM
    out_ref[...] = jnp.full(out_ref.shape, value_ref[0, 0], dtype=out_ref.dtype)


def constant_model_forward(batch: int, value: jax.Array) -> jax.Array:
    """Pallas equivalent of ConstantModel.forward.

    Args:
      batch: leading (batch) dimension of the PyTorch input x; only x.shape[0]
        is consumed by the module, so we take the size directly.
      value: scalar parameter (the constant target), float32.

    Returns:
      (batch, 1) float32 array filled with `value`.
    """
    # Lane-dense layout: batch elements laid out row-major over 128 lanes.
    rows_needed = pl.cdiv(batch, _LANES)
    # Sublane-aligned tile rows (multiple of 8), capped at ~1 MiB per tile.
    tile_rows = min(_MAX_TILE_ROWS, max(8, ((rows_needed + 7) // 8) * 8))
    num_tiles = pl.cdiv(rows_needed, tile_rows)
    rows_padded = num_tiles * tile_rows

    value_2d = jnp.reshape(value.astype(jnp.float32), (1, 1))

    slab = pl.pallas_call(
        _constant_kernel,
        out_shape=jax.ShapeDtypeStruct((rows_padded, _LANES), jnp.float32),
        grid=(num_tiles,),
        in_specs=[pl.BlockSpec(memory_space=pltpu.SMEM)],
        out_specs=pl.BlockSpec((tile_rows, _LANES), lambda i: (i, 0)),
        compiler_params=pltpu.CompilerParams(
            dimension_semantics=("parallel",)),
    )(value_2d)

    # Recover the (batch, 1) view required by the module's contract.
    return slab.reshape(-1)[:batch].reshape(batch, 1)


if __name__ == "__main__":
    key = jax.random.PRNGKey(0)

    # Deterministic "parameter" init: the constant target from __init__.
    target = 3.5
    value_param = jnp.asarray(target, dtype=jnp.float32)

    # Small NCHW input consistent with a typical calibration input.
    x = jax.random.normal(key, (2, 4, 16, 16), dtype=jnp.float32)

    out = constant_model_forward(x.shape[0], value_param)
    out = jax.block_until_ready(out)

    expected = jnp.full((x.shape[0], 1), target, dtype=jnp.float32)
    assert out.shape == (2, 1), out.shape
    assert out.dtype == jnp.float32, out.dtype
    assert bool(jnp.allclose(out, expected)), (out, expected)

    print("KERNEL_OK")
</pallas_src>

<mosaic_0001>
module attributes {stable_mosaic.version = 11 : i64} {
  func.func @_constant_kernel(%arg0: i32, %arg1: memref<1x1xf32, #tpu.memory_space<smem>>, %arg2: memref<8x128xf32, #tpu.memory_space<vmem>>) attributes {dimension_semantics = [#tpu.dimension_semantics<parallel>], iteration_bounds = array<i64: 1>, scalar_prefetch = 0 : i64, scratch_operands = 0 : i64, tpu.core_type = #tpu.core_type<tc>, window_params = [{transform_indices = @transform_0, window_bounds = array<i64: 1, 1>}, {transform_indices = @transform_1, window_bounds = array<i64: 8, 128>}]} {
    %c0 = arith.constant 0 : index
    %c0_0 = arith.constant 0 : index
    %0 = memref.load %arg1[%c0, %c0_0] : memref<1x1xf32, #tpu.memory_space<smem>>
    %1 = vector.broadcast %0 : f32 to vector<8x128xf32>
    %c0_1 = arith.constant 0 : index
    %c0_2 = arith.constant 0 : index
    %2 = vector.load %arg2[%c0_1, %c0_2] : memref<8x128xf32, #tpu.memory_space<vmem>>, vector<8x128xf32>
    tpu.vector_store %arg2[%c0_1, %c0_2], %1 {strides = array<i32>} : memref<8x128xf32, #tpu.memory_space<vmem>>, vector<8x128xf32>,
    return
  }
  func.func @transform_0(%arg0: i32) -> (i32, i32) {
    %c0_i32 = arith.constant 0 : i32
    %c0_i32_0 = arith.constant 0 : i32
    %c0_i32_1 = arith.constant 0 : i32
    return %c0_i32, %c0_i32_0 : i32, i32
  }
  func.func @transform_1(%arg0: i32) -> (i32, i32) {
    %c0_i32 = arith.constant 0 : i32
    %c0_i32_0 = arith.constant 0 : i32
    return %arg0, %c0_i32 : i32, i32
  }
}

</mosaic_0001>

<llo_original>
// kernel: tpu_custom_call.1
$region0: #{tpu_custom_call.1}
  #allocation0 [shape = 'u32[]', space=smem, size = 0x4, offset = 0x4, fixed_abs, tag = 'smem constant byte address 0x4 - core index']
  #allocation1 [shape = 'u32[72,128]{1,0:T(1,128)}', space=vmem, size = 0x9000, scoped, tag = 'internal scratch']
  #allocation2 [shape = 'f32[1,1]{1,0:T(1,128)S(6)}', space=smem, size = 0x200, scoped, tag = 'scoped memory for tpu_custom_call.1']
  %s0 = inlined_call_operand.<no memory space> [shape: f32[1,1], index: 0, kind: input, shape index: {}]
  %s1 = inlined_call_operand.hbm [shape: f32[8,128], index: 1, kind: output, shape index: {}]
  %s2 = sld [smem:[#allocation0]]
  $region14: #{tpu_custom_call.1} parent=0
    _
  %s4 = ssub.s32 1, %s2
  %s5 = scalar_select 0, %s4, %s2
  %6 = sst [smem:[#allocation2]] %s0
  $region1: #{tpu_custom_call.1} parent=0
    #allocation3 [shape = 'u8[4096]{0}', space=vmem, size = 0x1000, scoped, tag = 'output window, operand 0, single buffered']
    #allocation4 [shape = 's32[1]{0}', space=sflag, size = 0x4, scoped, tag = 'scoped memory for tpu_custom_call.1']
    %7 = vsyncpa [#allocation4], 0
    // Predicated region
    $region2: #{tpu_custom_call.1} parent=1 // pred_check
      _
    $region3: #{tpu_custom_call.1} parent=1 // pred_check_branch
      %9 = sbr.rel (0) target = $region5
    $region4: #{tpu_custom_call.1} parent=1 // pred_region
      _
    $region5: #{tpu_custom_call.1} parent=1 // pred_fallthru
      _
    %s10 = sld [smem:[#allocation2]]
    %v11 = vstv %s10
    %12 = vst [vmem:[#allocation3] sm:$0xff] %v11
    // Predicated region
    $region6: #{tpu_custom_call.1} parent=1 // pred_check
      _
    $region7: #{tpu_custom_call.1} parent=1 // pred_check_branch
      %14 = sbr.rel (0) target = $region9
    $region8: #{tpu_custom_call.1} parent=1 // pred_region
      %16 = vsyncadd [#allocation4], 0
      %s18 = sshll.u32 [#allocation3], 4
      %s19 = int_to_ptr.vmem [resolvable:$true] %s18
      %s20 = sshll.u32 %s1, 4
      %s21 = int_to_ptr.hbm [resolvable:$true] %s20
      %23 = dma.vmem_to_hbm [thread:$0]  %s19, 128, %s21, [#allocation4]
    $region9: #{tpu_custom_call.1} parent=1 // pred_fallthru
      _
    // Predicated region
    $region10: #{tpu_custom_call.1} parent=1 // pred_check
      _
    $region11: #{tpu_custom_call.1} parent=1 // pred_check_branch
      %25 = sbr.rel (0) target = $region13
    $region12: #{tpu_custom_call.1} parent=1 // pred_region
      %27 = dma.done [#allocation4], 128
    $region13: #{tpu_custom_call.1} parent=1 // pred_fallthru
      _
    %28 = vsyncpa [#allocation4], 1

</llo_original>
